<compile_context>
chip_gen: v7x
topology: tpu7x:2x2x1
jax: 0.10.0
libtpu: 0.0.40
codegen_flags: <defaults>
</compile_context>

<pallas_src>
import jax
import jax.numpy as jnp
from jax.experimental import pallas as pl
from jax.experimental.pallas import tpu as pltpu


# ----------------------------- helpers ------------------------------------- #

def _round_up(a, b):
    return ((a + b - 1) // b) * b


def _pack_factor(embed_dim):
    """Tokens packed per 128-lane output row."""
    if embed_dim % 128 == 0:
        return 1
    assert 128 % embed_dim == 0, (
        "EMBED must divide 128 or be a multiple of 128 for lane-dense packing")
    return 128 // embed_dim


def _choose_tiling(n_packed_rows, tile_np):
    """Pick (tile, n_blocks, padded_rows) with tile % 8 == 0, balanced blocks."""
    n_blocks = max(1, -(-n_packed_rows // tile_np))
    tile = _round_up(-(-n_packed_rows // n_blocks), 8)
    return tile, n_blocks, tile * n_blocks


def _pad_and_pack(flat, pack, padded_rows):
    """(N,) -> (padded_rows, pack), zero-padded tail."""
    total = padded_rows * pack
    n = flat.shape[0]
    if total > n:
        flat = jnp.pad(flat, (0, total - n))
    return flat.reshape(padded_rows, pack)


# ----------------------------- kernels ------------------------------------- #

def _discrete_embed_kernel(idx_ref, table_ref, out_ref):
    """Packed embedding lookup via one-hot matmul on the MXU.

    idx_ref:   (T, P)        int32, already offset by -var.min
    table_ref: (P*R, P*E)    block-diagonal kron(I_P, table)
    out_ref:   (T, P*E)      lane-dense (P*E is a multiple of 128)
    """
    idx = idx_ref[...]                                    # (T, P)
    t, p = idx.shape
    pr = table_ref.shape[0]
    r = pr // p
    iota_r = jax.lax.broadcasted_iota(jnp.int32, (t, r), 1)
    parts = [(idx[:, j:j + 1] == iota_r).astype(table_ref.dtype)
             for j in range(p)]                           # each (T, R)
    one_hot = parts[0] if p == 1 else jnp.concatenate(parts, axis=1)  # (T, P*R)
    out_ref[...] = jnp.dot(
        one_hot, table_ref[...], preferred_element_type=jnp.float32
    ).astype(out_ref.dtype)


def _continuous_linear_kernel(x_ref, w_ref, b_ref, out_ref):
    """Packed Linear(1, E): out[:, j*E:(j+1)*E] = x[:, j:j+1] * w + b (VPU).

    x_ref: (T, P) float32
    w_ref: (1, E) float32   (nn.Linear weight (E, 1), transposed)
    b_ref: (1, E) float32
    out_ref: (T, P*E) float32, lane-dense
    """
    x = x_ref[...]                                        # (T, P)
    p = x.shape[1]
    w = w_ref[...]
    b = b_ref[...]
    parts = [x[:, j:j + 1] * w + b for j in range(p)]     # each (T, E)
    out = parts[0] if p == 1 else jnp.concatenate(parts, axis=1)
    out_ref[...] = out.astype(out_ref.dtype)


# ----------------------------- wrappers ------------------------------------ #

def discrete_input_forward(x, table, var_min, *, tile_np=1024):
    """x: (B, S) integer-valued; table: (R, E). Returns (B, S, E)."""
    B, S = x.shape
    R, E = table.shape
    N = B * S
    P = _pack_factor(E)
    n_rows = -(-N // P)
    tile, n_blocks, padded_rows = _choose_tiling(n_rows, tile_np)

    idx = (x.astype(jnp.int32) - jnp.int32(var_min)).reshape(-1)
    idx_packed = _pad_and_pack(idx, P, padded_rows)                 # (rows, P)
    table_packed = jnp.kron(jnp.eye(P, dtype=table.dtype), table)   # (P*R, P*E)

    out = pl.pallas_call(
        _discrete_embed_kernel,
        out_shape=jax.ShapeDtypeStruct((padded_rows, P * E), table.dtype),
        grid=(n_blocks,),
        in_specs=[
            pl.BlockSpec((tile, P), lambda i: (i, 0)),
            pl.BlockSpec((P * R, P * E), lambda i: (0, 0)),
        ],
        out_specs=pl.BlockSpec((tile, P * E), lambda i: (i, 0)),
        compiler_params=pltpu.CompilerParams(
            dimension_semantics=("parallel",)),
    )(idx_packed, table_packed)
    # (rows, P*E) row-major == (rows*P, E) row-major: free reshape, then trim pad.
    return out.reshape(-1, E)[:N].reshape(B, S, E)


def continuous_input_forward(x, weight, bias, *, tile_np=1024):
    """x: (B, S) float; weight: (E, 1); bias: (E,). Returns (B, S, E) float32."""
    B, S = x.shape
    E = weight.shape[0]
    N = B * S
    P = _pack_factor(E)
    n_rows = -(-N // P)
    tile, n_blocks, padded_rows = _choose_tiling(n_rows, tile_np)

    x_packed = _pad_and_pack(x.astype(jnp.float32).reshape(-1), P, padded_rows)
    w_row = weight.reshape(1, E).astype(jnp.float32)
    b_row = bias.reshape(1, E).astype(jnp.float32)

    out = pl.pallas_call(
        _continuous_linear_kernel,
        out_shape=jax.ShapeDtypeStruct((padded_rows, P * E), jnp.float32),
        grid=(n_blocks,),
        in_specs=[
            pl.BlockSpec((tile, P), lambda i: (i, 0)),
            pl.BlockSpec((1, E), lambda i: (0, 0)),
            pl.BlockSpec((1, E), lambda i: (0, 0)),
        ],
        out_specs=pl.BlockSpec((tile, P * E), lambda i: (i, 0)),
        compiler_params=pltpu.CompilerParams(
            dimension_semantics=("parallel",)),
    )(x_packed, w_row, b_row)
    return out.reshape(-1, E)[:N].reshape(B, S, E)


# ----------------------------- demo / check -------------------------------- #

if __name__ == "__main__":
    EMBED = 32
    VAR_RANGE, VAR_MIN = 16, -3       # Discrete var: values in [min, min+range)

    key = jax.random.PRNGKey(0)
    k_xd, k_xc, k_tab, k_w, k_b, k_xd2, k_xc2 = jax.random.split(key, 7)

    embed_table = jax.random.normal(k_tab, (VAR_RANGE, EMBED), dtype=jnp.float32)
    lin_w = jax.random.normal(k_w, (EMBED, 1), dtype=jnp.float32) * 0.1  # Linear(1,E).weight
    lin_b = jax.random.normal(k_b, (EMBED,), dtype=jnp.float32) * 0.1    # Linear(1,E).bias

    # --- small shapes (B=2, S=8), single-block grid -------------------------
    B, S = 2, 8
    x_disc = jax.random.randint(k_xd, (B, S), VAR_MIN, VAR_MIN + VAR_RANGE,
                                dtype=jnp.int32)
    out_disc = discrete_input_forward(x_disc, embed_table, VAR_MIN)
    jax.block_until_ready(out_disc)
    ref_disc = embed_table[(x_disc - VAR_MIN).reshape(-1)].reshape(B, S, EMBED)
    assert out_disc.shape == (B, S, EMBED)
    assert jnp.allclose(out_disc, ref_disc, atol=1e-5), "discrete mismatch"

    x_cont = jax.random.normal(k_xc, (B, S), dtype=jnp.float32)
    out_cont = continuous_input_forward(x_cont, lin_w, lin_b)
    jax.block_until_ready(out_cont)
    ref_cont = (x_cont[..., None] * lin_w.reshape(1, 1, EMBED)
                + lin_b.reshape(1, 1, EMBED))
    assert out_cont.shape == (B, S, EMBED)
    assert jnp.allclose(out_cont, ref_cont, atol=1e-5), "continuous mismatch"

    # --- larger shapes: exercises padding + multi-block (parallel) grid -----
    B2, S2 = 4, 1037
    x_disc2 = jax.random.randint(k_xd2, (B2, S2), VAR_MIN, VAR_MIN + VAR_RANGE,
                                 dtype=jnp.int32)
    out_disc2 = discrete_input_forward(x_disc2, embed_table, VAR_MIN)
    jax.block_until_ready(out_disc2)
    ref_disc2 = embed_table[(x_disc2 - VAR_MIN).reshape(-1)].reshape(B2, S2, EMBED)
    assert jnp.allclose(out_disc2, ref_disc2, atol=1e-5), "discrete (large) mismatch"

    x_cont2 = jax.random.normal(k_xc2, (B2, S2), dtype=jnp.float32)
    out_cont2 = continuous_input_forward(x_cont2, lin_w, lin_b)
    jax.block_until_ready(out_cont2)
    ref_cont2 = (x_cont2[..., None] * lin_w.reshape(1, 1, EMBED)
                 + lin_b.reshape(1, 1, EMBED))
    assert jnp.allclose(out_cont2, ref_cont2, atol=1e-5), "continuous (large) mismatch"

    print("KERNEL_OK")
</pallas_src>

<mosaic_0001>
module attributes {stable_mosaic.version = 11 : i64} {
  func.func @_discrete_embed_kernel(%arg0: i32, %arg1: memref<8x4xi32, #tpu.memory_space<vmem>>, %arg2: memref<64x128xf32, #tpu.memory_space<vmem>>, %arg3: memref<8x128xf32, #tpu.memory_space<vmem>>) attributes {dimension_semantics = [#tpu.dimension_semantics<parallel>], iteration_bounds = array<i64: 1>, scalar_prefetch = 0 : i64, scratch_operands = 0 : i64, tpu.core_type = #tpu.core_type<tc>, window_params = [{transform_indices = @transform_0, window_bounds = array<i64: 8, 4>}, {pipeline_mode = #tpu.pipeline_mode<synchronous>, transform_indices = @transform_1, window_bounds = array<i64: 64, 128>}, {transform_indices = @transform_2, window_bounds = array<i64: 8, 128>}]} {
    %c0 = arith.constant 0 : index
    %c0_0 = arith.constant 0 : index
    %0 = vector.load %arg1[%c0, %c0_0] : memref<8x4xi32, #tpu.memory_space<vmem>>, vector<8x4xi32>
    %1 = tpu.iota {dimensions = array<i32: 1>} : vector<8x16xi32>
    %2 = vector.extract_strided_slice %0 {offsets = [0, 0], sizes = [8, 1], strides = [1, 1]} : vector<8x4xi32> to vector<8x1xi32>
    %3 = vector.broadcast %2 : vector<8x1xi32> to vector<8x16xi32>
    %4 = arith.cmpi eq, %3, %1 : vector<8x16xi32>
    %5 = arith.extui %4 : vector<8x16xi1> to vector<8x16xi32>
    %6 = arith.sitofp %5 : vector<8x16xi32> to vector<8x16xf32>
    %7 = vector.extract_strided_slice %0 {offsets = [0, 1], sizes = [8, 1], strides = [1, 1]} : vector<8x4xi32> to vector<8x1xi32>
    %8 = vector.broadcast %7 : vector<8x1xi32> to vector<8x16xi32>
    %9 = arith.cmpi eq, %8, %1 : vector<8x16xi32>
    %10 = arith.extui %9 : vector<8x16xi1> to vector<8x16xi32>
    %11 = arith.sitofp %10 : vector<8x16xi32> to vector<8x16xf32>
    %12 = vector.extract_strided_slice %0 {offsets = [0, 2], sizes = [8, 1], strides = [1, 1]} : vector<8x4xi32> to vector<8x1xi32>
    %13 = vector.broadcast %12 : vector<8x1xi32> to vector<8x16xi32>
    %14 = arith.cmpi eq, %13, %1 : vector<8x16xi32>
    %15 = arith.extui %14 : vector<8x16xi1> to vector<8x16xi32>
    %16 = arith.sitofp %15 : vector<8x16xi32> to vector<8x16xf32>
    %17 = vector.extract_strided_slice %0 {offsets = [0, 3], sizes = [8, 1], strides = [1, 1]} : vector<8x4xi32> to vector<8x1xi32>
    %18 = vector.broadcast %17 : vector<8x1xi32> to vector<8x16xi32>
    %19 = arith.cmpi eq, %18, %1 : vector<8x16xi32>
    %20 = arith.extui %19 : vector<8x16xi1> to vector<8x16xi32>
    %21 = arith.sitofp %20 : vector<8x16xi32> to vector<8x16xf32>
    %22 = tpu.concatenate %6, %11, %16, %21 in 1 : vector<8x16xf32>, vector<8x16xf32>, vector<8x16xf32>, vector<8x16xf32> -> vector<8x64xf32>
    %c0_1 = arith.constant 0 : index
    %c0_2 = arith.constant 0 : index
    %23 = vector.load %arg2[%c0_1, %c0_2] : memref<64x128xf32, #tpu.memory_space<vmem>>, vector<64x128xf32>
    %cst = arith.constant dense<0.000000e+00> : vector<8x128xf32>
    %24 = tpu.matmul %22, %23, %cst {dimension_numbers = #tpu.dot_dimension_numbers<[1], [0], [0], [1], [0, 0, 1, 1], [], []>} : vector<8x64xf32>, vector<64x128xf32>, vector<8x128xf32> -> vector<8x128xf32>
    %c0_3 = arith.constant 0 : index
    %c0_4 = arith.constant 0 : index
    %25 = vector.load %arg3[%c0_3, %c0_4] : memref<8x128xf32, #tpu.memory_space<vmem>>, vector<8x128xf32>
    tpu.vector_store %arg3[%c0_3, %c0_4], %24 {strides = array<i32>} : memref<8x128xf32, #tpu.memory_space<vmem>>, vector<8x128xf32>,
    return
  }
  func.func @transform_0(%arg0: i32) -> (i32, i32) {
    %c0_i32 = arith.constant 0 : i32
    %c0_i32_0 = arith.constant 0 : i32
    return %arg0, %c0_i32 : i32, i32
  }
  func.func @transform_1(%arg0: i32) -> (i32, i32) {
    %c0_i32 = arith.constant 0 : i32
    %c0_i32_0 = arith.constant 0 : i32
    %c0_i32_1 = arith.constant 0 : i32
    return %c0_i32, %c0_i32_0 : i32, i32
  }
  func.func @transform_2(%arg0: i32) -> (i32, i32) {
    %c0_i32 = arith.constant 0 : i32
    %c0_i32_0 = arith.constant 0 : i32
    return %arg0, %c0_i32 : i32, i32
  }
}

</mosaic_0001>

<llo_original>
// kernel: tpu_custom_call.1
$region0: #{tpu_custom_call.1}
  #allocation0 [shape = 'u32[]', space=smem, size = 0x4, offset = 0x4, fixed_abs, tag = 'smem constant byte address 0x4 - core index']
  #allocation1 [shape = 'u32[144,128]{1,0:T(1,128)}', space=vmem, size = 0x12000, scoped, tag = 'internal scratch']
  %s0 = inlined_call_operand.vmem [shape: s32[8,4], index: 0, kind: input, shape index: {}]
  %s1 = inlined_call_operand.hbm [shape: f32[64,128], index: 1, kind: input, shape index: {}]
  %s2 = inlined_call_operand.hbm [shape: f32[8,128], index: 2, kind: output, shape index: {}]
  %s3 = sld [smem:[#allocation0]]
  $region22: #{tpu_custom_call.1} parent=0
    _
  %s5 = ssub.s32 1, %s3
  %s6 = scalar_select 0, %s5, %s3
  $region1: #{tpu_custom_call.1} parent=0
    #allocation2 [shape = 'u8[32768]{0}', space=vmem, size = 0x8000, scoped, tag = 'input window, operand 1, single buffered']
    #allocation3 [shape = 's32[1]{0}', space=sflag, size = 0x4, scoped, tag = 'scoped memory for tpu_custom_call.1']
    #allocation4 [shape = 's32[1]{0}', space=sflag, size = 0x4, scoped, tag = 'scoped memory for tpu_custom_call.1']
    #allocation5 [shape = 'u8[4096]{0}', space=vmem, size = 0x1000, scoped, tag = 'output window, operand 0, single buffered']
    %7 = vsyncpa [#allocation3], 0
    %8 = vsyncpa [#allocation4], 0
    // Predicated region
    $region2: #{tpu_custom_call.1} parent=1 // pred_check
      _
    $region3: #{tpu_custom_call.1} parent=1 // pred_check_branch
      %10 = sbr.rel (0) target = $region5
    $region4: #{tpu_custom_call.1} parent=1 // pred_region
      _
    $region5: #{tpu_custom_call.1} parent=1 // pred_fallthru
      _
    // Predicated region
    $region6: #{tpu_custom_call.1} parent=1 // pred_check
      _
    $region7: #{tpu_custom_call.1} parent=1 // pred_check_branch
      %12 = sbr.rel (0) target = $region9
    $region8: #{tpu_custom_call.1} parent=1 // pred_region
      %s14 = ssub.s32 1024, 1024
      %15 = vsyncadd [#allocation3], %s14
      %s16 = sshll.u32 [#allocation2], 4
      %s17 = int_to_ptr.vmem [resolvable:$true] %s16
      %22 = dma.hbm_to_vmem [thread:$0]  %s1, 1024, %s17, [#allocation3], 128, 128, 8
    $region9: #{tpu_custom_call.1} parent=1 // pred_fallthru
      _
    // Predicated region
    $region10: #{tpu_custom_call.1} parent=1 // pred_check
      _
    $region11: #{tpu_custom_call.1} parent=1 // pred_check_branch
      %24 = sbr.rel (0) target = $region13
    $region12: #{tpu_custom_call.1} parent=1 // pred_region
      %25 = dma.done [#allocation3], 1024
    $region13: #{tpu_custom_call.1} parent=1 // pred_fallthru
      _
    %v26 = vld [vmem:[%s0] sm:$0xff]
    %v27 = vlaneseq
    %v28 = vand.u32 %v27, 127
    %29 = vset.pattern.permute.xlu0 0
    %30 = vperm.xlu0 %29, %v26
    %v31 = vpop.permute.xlu0 %30
    %vm32 = vcmp.eq.s32.totalorder %v31, %v28
    %v33 = vsel %vm32, 1, 0
    %v34 = vcvt.s32.f32 %v33
    %35 = vset.pattern.permute.xlu0 1
    %36 = vperm.xlu0 %35, %v26
    %v37 = vpop.permute.xlu0 %36
    %vm38 = vcmp.eq.s32.totalorder %v37, %v28
    %v39 = vsel %vm38, 1, 0
    %v40 = vcvt.s32.f32 %v39
    %41 = vset.pattern.permute.xlu0 2
    %42 = vperm.xlu0 %41, %v26
    %v43 = vpop.permute.xlu0 %42
    %vm44 = vcmp.eq.s32.totalorder %v43, %v28
    %v45 = vsel %vm44, 1, 0
    %v46 = vcvt.s32.f32 %v45
    %47 = vset.pattern.permute.xlu0 3
    %48 = vperm.xlu0 %47, %v26
    %v49 = vpop.permute.xlu0 %48
    %vm50 = vcmp.eq.s32.totalorder %v49, %v28
    %v51 = vsel %vm50, 1, 0
    %v52 = vcvt.s32.f32 %v51
    %54 = vrot.lane.b32.xlu0 %v40, 16
    %v55 = vpop.permute.xlu0 %54
    %58 = vrot.lane.b32.xlu0 %v46, 32
    %v59 = vpop.permute.xlu0 %58
    %62 = vrot.lane.b32.xlu0 %v52, 48
    %v63 = vpop.permute.xlu0 %62
    %vm65 = vcmask 130048
    %v66 = vsel %vm65, %v34, %v55
    %vm67 = vcmask 261120
    %v68 = vsel %vm67, %v66, %v59
    %vm69 = vcmask 392192
    %v70 = vsel %vm69, %v68, %v63
    %v71 = vld [vmem:[#allocation2] sm:$0xff]
    %v72 = vld [vmem:[#allocation2 + $0x8] sm:$0xff]
    %v73 = vld [vmem:[#allocation2 + $0x10] sm:$0xff]
    %v74 = vld [vmem:[#allocation2 + $0x18] sm:$0xff]
    %v75 = vld [vmem:[#allocation2 + $0x20] sm:$0xff]
    %v76 = vld [vmem:[#allocation2 + $0x28] sm:$0xff]
    %v77 = vld [vmem:[#allocation2 + $0x30] sm:$0xff]
    %v78 = vld [vmem:[#allocation2 + $0x38] sm:$0xff]
    %vm79 = vcmask 523264
    %v81 = vsel %vm79, %v70, 0
    %83 = vmatprep.subr.mxu0 0.0
    %84 = vmatpush1.msra.mxu0 %v71
    %85 = vmatprep.subr.mxu0 0.0
    %86 = vmatpush1.msra.mxu0 %v72
    %87 = vmatprep.subr.mxu0 0.0
    %88 = vmatpush1.msra.mxu0 %v73
    %89 = vmatprep.subr.mxu0 0.0
    %90 = vmatpush1.msra.mxu0 %v74
    %91 = vmatprep.subr.mxu0 0.0
    %92 = vmatpush1.msra.mxu0 %v75
    %93 = vmatprep.subr.mxu0 0.0
    %94 = vmatpush1.msra.mxu0 %v76
    %95 = vmatprep.subr.mxu0 0.0
    %96 = vmatpush1.msra.mxu0 %v77
    %97 = vmatprep.subr.mxu0 0.0
    %98 = vmatpush1.msra.mxu0 %v78
    %99 = vmatprep.subr.mxu0 0.0
    %100 = vmatpush1.msra.mxu0 0.0
    %101 = vmatprep.subr.mxu0 0.0
    %102 = vmatpush1.msra.mxu0 0.0
    %103 = vmatprep.subr.mxu0 0.0
    %104 = vmatpush1.msra.mxu0 0.0
    %105 = vmatprep.subr.mxu0 0.0
    %106 = vmatpush1.msra.mxu0 0.0
    %107 = vmatprep.subr.mxu0 0.0
    %108 = vmatpush1.msra.mxu0 0.0
    %109 = vmatprep.subr.mxu0 0.0
    %110 = vmatpush1.msra.mxu0 0.0
    %111 = vmatprep.subr.mxu0 0.0
    %112 = vmatpush1.msra.mxu0 0.0
    %113 = vmatprep.subr.mxu0 0.0
    %114 = vmatpush1.msra.mxu0 0.0
    %115 = vmatprep.subr.mxu0 0.0
    %116 = vmatpush1.msra.mxu0 0.0
    %117 = vmatprep.subr.mxu0 0.0
    %118 = vmatpush1.msra.mxu0 0.0
    %119 = vmatprep.subr.mxu0 0.0
    %120 = vmatpush1.msra.mxu0 0.0
    %121 = vmatprep.subr.mxu0 0.0
    %122 = vmatpush1.msra.mxu0 0.0
    %123 = vmatprep.subr.mxu0 0.0
    %124 = vmatpush1.msra.mxu0 0.0
    %125 = vmatprep.subr.mxu0 0.0
    %126 = vmatpush1.msra.mxu0 0.0
    %127 = vmatprep.subr.mxu0 0.0
    %128 = vmatpush1.msra.mxu0 0.0
    %129 = vmatprep.subr.mxu0 0.0
    %130 = vmatpush1.msra.mxu0 0.0
    %131 = vmatprep.subr.mxu0 0.0
    %132 = vmatpush1.msra.mxu0 0.0
    %133 = vmatprep.subr.mxu0 0.0
    %134 = vmatpush1.msra.mxu0 0.0
    %135 = vmatprep.subr.mxu0 0.0
    %136 = vmatpush1.msra.mxu0 0.0
    %137 = vmatprep.subr.mxu0 0.0
    %138 = vmatpush1.msra.mxu0 0.0
    %139 = vmatprep.subr.mxu0 0.0
    %140 = vmatpush1.msra.mxu0 0.0
    %141 = vmatprep.subr.mxu0 0.0
    %142 = vmatpush1.msra.mxu0 0.0
    %143 = vmatprep.subr.mxu0 0.0
    %144 = vmatpush1.msra.mxu0 0.0
    %145 = vmatprep.subr.mxu0 0.0
    %146 = vmatpush1.msra.mxu0 0.0
    %147 = vmatprep.mubr.f32.mxu0 0.0
    %148 = vmatmul.mubr.f32.gmra.mrb[0].mxu0 %v81
    %v149 = vpop.f32.mrb[0].mxu0
    %v150 = vadd.f32 0.0, %v149
    %v151 = vpop.f32.mrb[0].mxu0
    %152 = vdwg.mxu0
    %153 = vst [vmem:[#allocation5] sm:$0xff] %v150
    // Predicated region
    $region14: #{tpu_custom_call.1} parent=1 // pred_check
      _
    $region15: #{tpu_custom_call.1} parent=1 // pred_check_branch
      %155 = sbr.rel (0) target = $region17
    $region16: #{tpu_custom_call.1} parent=1 // pred_region
      %s157 = ssub.s32 128, 128
      %158 = vsyncadd [#allocation4], %s157
      %s160 = sshll.u32 [#allocation5], 4
      %s161 = int_to_ptr.vmem [resolvable:$true] %s160
      %163 = dma.vmem_to_hbm [thread:$0]  %s161, 128, %s2, [#allocation4]
    $region17: #{tpu_custom_call.1} parent=1 // pred_fallthru
      _
    // Predicated region
    $region18: #{tpu_custom_call.1} parent=1 // pred_check
      _
    $region19: #{tpu_custom_call.1} parent=1 // pred_check_branch
      %165 = sbr.rel (0) target = $region21
    $region20: #{tpu_custom_call.1} parent=1 // pred_region
      %166 = dma.done [#allocation4], 128
    $region21: #{tpu_custom_call.1} parent=1 // pred_fallthru
      _
    %167 = vsyncpa [#allocation3], 1
    %168 = vsyncpa [#allocation4], 1

</llo_original>
